<compile_context>
chip_gen: v5e
topology: v5e:2x2
jax: 0.10.0
libtpu: 0.0.40
codegen_flags: <defaults>
</compile_context>

<pallas_src>
import jax
import jax.numpy as jnp
from jax.experimental import pallas as pl
from jax.experimental.pallas import tpu as pltpu

EPS = 1e-5
STRIDES = (2, 2, 2, 1)                 # FPN_Tiny(in_shape, [2, 2, 2, 1])
_VMEM = pl.BlockSpec(memory_space=pltpu.MemorySpace.VMEM)


# ----------------------------------------------------------------------------
# Pallas kernel: the entire routing block, fully fused.
# ----------------------------------------------------------------------------
def _routing_block_kernel(x_ref, w1_ref, w2_ref, w3_ref, w4_ref,
                          b1_ref, b2_ref, b3_ref, b4_ref,
                          pool_ref, gamma_ref, beta_ref, o_ref):
    y = x_ref[...]                                           # (N, C*H*W) f32
    for w_ref, b_ref in ((w1_ref, b1_ref), (w2_ref, b2_ref),
                         (w3_ref, b3_ref), (w4_ref, b4_ref)):
        # bf16 MXU operands, f32 accumulation; lane axis = C*Ho*Wo (dense).
        acc = jnp.dot(y.astype(jnp.bfloat16), w_ref[...],
                      preferred_element_type=jnp.float32)
        y = jnp.maximum(acc + b_ref[...], 0.0)               # f32 bias + ReLU epilogue

    # Global average pool as one tiny f32 matmul: (N, C*Hf*Wf) @ (C*Hf*Wf, C).
    pooled = jnp.dot(y, pool_ref[...], preferred_element_type=jnp.float32)

    # BatchNorm1d with batch statistics (training-mode forward, biased var).
    mean = jnp.mean(pooled, axis=0, keepdims=True)
    var = jnp.mean((pooled - mean) ** 2, axis=0, keepdims=True)
    xhat = (pooled - mean) * jax.lax.rsqrt(var + EPS)
    o_ref[...] = (xhat * gamma_ref[...] + beta_ref[...]).astype(o_ref.dtype)


# ----------------------------------------------------------------------------
# Parameter-only preprocessing: expand each 3x3 conv (PyTorch OIHW weights)
# into a dense matmul on NCHW-flattened activations.  Done once at init time.
# ----------------------------------------------------------------------------
def _conv_as_matmul(w_oihw, h_in, w_in, stride):
    """(C*Hi*Wi) -> (C*Ho*Wo) matrix equivalent to Conv2d(k=3, pad=1, stride)."""
    c_out, c_in = int(w_oihw.shape[0]), int(w_oihw.shape[1])
    h_out = (h_in + 2 - 3) // stride + 1
    w_out = (w_in + 2 - 3) // stride + 1

    dh = jnp.arange(3).reshape(3, 1, 1, 1)
    dw = jnp.arange(3).reshape(1, 3, 1, 1)
    oh = jnp.arange(h_out).reshape(1, 1, h_out, 1)
    ow = jnp.arange(w_out).reshape(1, 1, 1, w_out)
    ih = stride * oh + dh - 1
    iw = stride * ow + dw - 1
    valid = (ih >= 0) & (ih < h_in) & (iw >= 0) & (iw < w_in)
    # input pixel hit by tap t=(dh,dw) of output pixel q; -1 == zero padding.
    pix = jnp.where(valid, ih * w_in + iw, -1).reshape(9, h_out * w_out)
    gather = jax.nn.one_hot(pix, h_in * w_in, dtype=jnp.float32)   # (9, Q, P)

    w9 = w_oihw.reshape(c_out, c_in, 9).astype(jnp.float32)        # (o, i, t)
    m = jnp.einsum('tqp,oit->ipoq', gather, w9)                    # (Ci, P, Co, Q)
    m = m.reshape(c_in * h_in * w_in, c_out * h_out * w_out)
    return m, h_out, w_out


def init_block_params(key, c):
    ks = jax.random.split(key, 8)
    return dict(
        conv_w=[jax.random.normal(ks[i], (c, c, 3, 3), jnp.float32) * 0.1
                for i in range(4)],
        conv_b=[jax.random.normal(ks[4 + i], (c,), jnp.float32) * 0.01
                for i in range(4)],
        gamma=jnp.ones((1, c), jnp.float32),     # BatchNorm1d(in_shape[0]) weight
        beta=jnp.zeros((1, c), jnp.float32),     # BatchNorm1d(in_shape[0]) bias
    )


def prepare_block_params(params, in_shape):
    c, h, w = in_shape
    ws, bs = [], []
    cur_h, cur_w = h, w
    for conv_w, conv_b, s in zip(params["conv_w"], params["conv_b"], STRIDES):
        m, cur_h, cur_w = _conv_as_matmul(conv_w, cur_h, cur_w, s)
        ws.append(m.astype(jnp.bfloat16))                            # bf16 weights (halved HBM)
        bs.append(jnp.repeat(conv_b, cur_h * cur_w).reshape(1, -1)
                  .astype(jnp.float32))
    hw = cur_h * cur_w
    pool = jnp.repeat(jnp.eye(c, dtype=jnp.float32), hw, axis=0) / float(hw)
    return dict(ws=ws, bs=bs, pool=pool,
                gamma=params["gamma"], beta=params["beta"])


# ----------------------------------------------------------------------------
# RoutingBlockVector / RoutingVector equivalents.
# ----------------------------------------------------------------------------
def routing_block_forward(prep, x_nchw):
    n = int(x_nchw.shape[0])
    c = int(prep["gamma"].shape[1])
    x_flat = x_nchw.reshape(n, -1).astype(jnp.float32)       # NCHW-flatten (free view)

    operands = [x_flat, *prep["ws"], *prep["bs"],
                prep["pool"], prep["gamma"], prep["beta"]]

    flops = 2 * n * sum(int(w.shape[0]) * int(w.shape[1]) for w in prep["ws"])
    flops += 2 * n * int(prep["pool"].shape[0]) * c
    bytes_accessed = sum(int(o.size) * o.dtype.itemsize for o in operands) + n * c * 4

    return pl.pallas_call(
        _routing_block_kernel,
        out_shape=jax.ShapeDtypeStruct((n, c), jnp.float32),
        in_specs=[_VMEM] * len(operands),
        out_specs=_VMEM,
        compiler_params=pltpu.CompilerParams(vmem_limit_bytes=32 * 1024 * 1024),
        cost_estimate=pl.CostEstimate(flops=flops, transcendentals=2 * c,
                                      bytes_accessed=bytes_accessed),
    )(*operands)


def routing_vector_forward(params_list, x_nchw):
    n, c, h, w = x_nchw.shape
    out = x_nchw
    for p in params_list:
        prep = prepare_block_params(p, (c, h, w))
        out = routing_block_forward(prep, out)
        # TODO(synk): stacking >1 RoutingBlockVector requires FPN_Tiny to accept
        # the (N, C) vector output of the previous block; undefined upstream, so
        # the demo uses routing_name_list = ['Tiny_FPN'] (a single block).
    return out


if __name__ == "__main__":
    key = jax.random.PRNGKey(0)
    kx, kp = jax.random.split(key)

    N, C, H, W = 2, 4, 16, 16                    # in_shape = (C, H, W)
    x = jax.random.normal(kx, (N, C, H, W), jnp.float32)

    params_list = [init_block_params(kp, C)]     # routing_name_list = ['Tiny_FPN']

    out = routing_vector_forward(params_list, x)
    out = jax.block_until_ready(out)
    assert out.shape == (N, C) and out.dtype == jnp.float32
    print("KERNEL_OK")
</pallas_src>

<mosaic_0001>
module attributes {stable_mosaic.version = 11 : i64} {
  func.func @_routing_block_kernel(%arg0: memref<2x1024xf32, #tpu.memory_space<vmem>>, %arg1: memref<1024x256xbf16, #tpu.memory_space<vmem>>, %arg2: memref<256x64xbf16, #tpu.memory_space<vmem>>, %arg3: memref<64x16xbf16, #tpu.memory_space<vmem>>, %arg4: memref<16x16xbf16, #tpu.memory_space<vmem>>, %arg5: memref<1x256xf32, #tpu.memory_space<vmem>>, %arg6: memref<1x64xf32, #tpu.memory_space<vmem>>, %arg7: memref<1x16xf32, #tpu.memory_space<vmem>>, %arg8: memref<1x16xf32, #tpu.memory_space<vmem>>, %arg9: memref<16x4xf32, #tpu.memory_space<vmem>>, %arg10: memref<1x4xf32, #tpu.memory_space<vmem>>, %arg11: memref<1x4xf32, #tpu.memory_space<vmem>>, %arg12: memref<2x4xf32, #tpu.memory_space<vmem>>) attributes {dimension_semantics = [], scalar_prefetch = 0 : i64, scratch_operands = 0 : i64, tpu.core_type = #tpu.core_type<tc>} {
    %c0 = arith.constant 0 : index
    %c0_0 = arith.constant 0 : index
    %0 = vector.load %arg0[%c0, %c0_0] : memref<2x1024xf32, #tpu.memory_space<vmem>>, vector<2x1024xf32>
    %1 = arith.truncf %0 : vector<2x1024xf32> to vector<2x1024xbf16>
    %c0_1 = arith.constant 0 : index
    %c0_2 = arith.constant 0 : index
    %2 = vector.load %arg1[%c0_1, %c0_2] : memref<1024x256xbf16, #tpu.memory_space<vmem>>, vector<1024x256xbf16>
    %cst = arith.constant dense<0.000000e+00> : vector<2x256xf32>
    %3 = tpu.matmul %1, %2, %cst {dimension_numbers = #tpu.dot_dimension_numbers<[1], [0], [0], [1], [0, 0, 1, 1], [], []>} : vector<2x1024xbf16>, vector<1024x256xbf16>, vector<2x256xf32> -> vector<2x256xf32>
    %c0_3 = arith.constant 0 : index
    %c0_4 = arith.constant 0 : index
    %4 = vector.load %arg5[%c0_3, %c0_4] : memref<1x256xf32, #tpu.memory_space<vmem>>, vector<1x256xf32>
    %5 = vector.broadcast %4 : vector<1x256xf32> to vector<2x256xf32>
    %6 = arith.addf %3, %5 : vector<2x256xf32>
    %cst_5 = arith.constant 0.000000e+00 : f32
    %7 = vector.broadcast %cst_5 : f32 to vector<2x256xf32>
    %8 = arith.maximumf %6, %7 : vector<2x256xf32>
    %9 = arith.truncf %8 : vector<2x256xf32> to vector<2x256xbf16>
    %c0_6 = arith.constant 0 : index
    %c0_7 = arith.constant 0 : index
    %10 = vector.load %arg2[%c0_6, %c0_7] : memref<256x64xbf16, #tpu.memory_space<vmem>>, vector<256x64xbf16>
    %cst_8 = arith.constant dense<0.000000e+00> : vector<2x64xf32>
    %11 = tpu.matmul %9, %10, %cst_8 {dimension_numbers = #tpu.dot_dimension_numbers<[1], [0], [0], [1], [0, 0, 1, 1], [], []>} : vector<2x256xbf16>, vector<256x64xbf16>, vector<2x64xf32> -> vector<2x64xf32>
    %c0_9 = arith.constant 0 : index
    %c0_10 = arith.constant 0 : index
    %12 = vector.load %arg6[%c0_9, %c0_10] : memref<1x64xf32, #tpu.memory_space<vmem>>, vector<1x64xf32>
    %13 = vector.broadcast %12 : vector<1x64xf32> to vector<2x64xf32>
    %14 = arith.addf %11, %13 : vector<2x64xf32>
    %cst_11 = arith.constant 0.000000e+00 : f32
    %15 = vector.broadcast %cst_11 : f32 to vector<2x64xf32>
    %16 = arith.maximumf %14, %15 : vector<2x64xf32>
    %17 = arith.truncf %16 : vector<2x64xf32> to vector<2x64xbf16>
    %c0_12 = arith.constant 0 : index
    %c0_13 = arith.constant 0 : index
    %18 = vector.load %arg3[%c0_12, %c0_13] : memref<64x16xbf16, #tpu.memory_space<vmem>>, vector<64x16xbf16>
    %cst_14 = arith.constant dense<0.000000e+00> : vector<2x16xf32>
    %19 = tpu.matmul %17, %18, %cst_14 {dimension_numbers = #tpu.dot_dimension_numbers<[1], [0], [0], [1], [0, 0, 1, 1], [], []>} : vector<2x64xbf16>, vector<64x16xbf16>, vector<2x16xf32> -> vector<2x16xf32>
    %c0_15 = arith.constant 0 : index
    %c0_16 = arith.constant 0 : index
    %20 = vector.load %arg7[%c0_15, %c0_16] : memref<1x16xf32, #tpu.memory_space<vmem>>, vector<1x16xf32>
    %21 = vector.broadcast %20 : vector<1x16xf32> to vector<2x16xf32>
    %22 = arith.addf %19, %21 : vector<2x16xf32>
    %cst_17 = arith.constant 0.000000e+00 : f32
    %23 = vector.broadcast %cst_17 : f32 to vector<2x16xf32>
    %24 = arith.maximumf %22, %23 : vector<2x16xf32>
    %25 = arith.truncf %24 : vector<2x16xf32> to vector<2x16xbf16>
    %c0_18 = arith.constant 0 : index
    %c0_19 = arith.constant 0 : index
    %26 = vector.load %arg4[%c0_18, %c0_19] : memref<16x16xbf16, #tpu.memory_space<vmem>>, vector<16x16xbf16>
    %cst_20 = arith.constant dense<0.000000e+00> : vector<2x16xf32>
    %27 = tpu.matmul %25, %26, %cst_20 {dimension_numbers = #tpu.dot_dimension_numbers<[1], [0], [0], [1], [0, 0, 1, 1], [], []>} : vector<2x16xbf16>, vector<16x16xbf16>, vector<2x16xf32> -> vector<2x16xf32>
    %c0_21 = arith.constant 0 : index
    %c0_22 = arith.constant 0 : index
    %28 = vector.load %arg8[%c0_21, %c0_22] : memref<1x16xf32, #tpu.memory_space<vmem>>, vector<1x16xf32>
    %29 = vector.broadcast %28 : vector<1x16xf32> to vector<2x16xf32>
    %30 = arith.addf %27, %29 : vector<2x16xf32>
    %cst_23 = arith.constant 0.000000e+00 : f32
    %31 = vector.broadcast %cst_23 : f32 to vector<2x16xf32>
    %32 = arith.maximumf %30, %31 : vector<2x16xf32>
    %c0_24 = arith.constant 0 : index
    %c0_25 = arith.constant 0 : index
    %33 = vector.load %arg9[%c0_24, %c0_25] : memref<16x4xf32, #tpu.memory_space<vmem>>, vector<16x4xf32>
    %cst_26 = arith.constant dense<0.000000e+00> : vector<2x4xf32>
    %34 = tpu.matmul %32, %33, %cst_26 {dimension_numbers = #tpu.dot_dimension_numbers<[1], [0], [0], [1], [0, 0, 1, 1], [], []>} : vector<2x16xf32>, vector<16x4xf32>, vector<2x4xf32> -> vector<2x4xf32>
    %cst_27 = arith.constant dense<0.000000e+00> : vector<4xf32>
    %35 = vector.multi_reduction <add>, %34, %cst_27 [0] : vector<2x4xf32> to vector<4xf32>
    %36 = vector.shape_cast %35 : vector<4xf32> to vector<1x4xf32>
    %cst_28 = arith.constant 2.000000e+00 : f32
    %37 = vector.broadcast %cst_28 : f32 to vector<1x4xf32>
    %38 = arith.divf %36, %37 : vector<1x4xf32>
    %39 = vector.broadcast %38 : vector<1x4xf32> to vector<2x4xf32>
    %40 = arith.subf %34, %39 : vector<2x4xf32>
    %41 = arith.mulf %40, %40 : vector<2x4xf32>
    %cst_29 = arith.constant dense<0.000000e+00> : vector<4xf32>
    %42 = vector.multi_reduction <add>, %41, %cst_29 [0] : vector<2x4xf32> to vector<4xf32>
    %43 = vector.shape_cast %42 : vector<4xf32> to vector<1x4xf32>
    %cst_30 = arith.constant 2.000000e+00 : f32
    %44 = vector.broadcast %cst_30 : f32 to vector<1x4xf32>
    %45 = arith.divf %43, %44 : vector<1x4xf32>
    %46 = vector.broadcast %38 : vector<1x4xf32> to vector<2x4xf32>
    %47 = arith.subf %34, %46 : vector<2x4xf32>
    %cst_31 = arith.constant 9.99999974E-6 : f32
    %48 = vector.broadcast %cst_31 : f32 to vector<1x4xf32>
    %49 = arith.addf %45, %48 : vector<1x4xf32>
    %50 = math.rsqrt %49 : vector<1x4xf32>
    %51 = vector.broadcast %50 : vector<1x4xf32> to vector<2x4xf32>
    %52 = arith.mulf %47, %51 : vector<2x4xf32>
    %c0_32 = arith.constant 0 : index
    %c0_33 = arith.constant 0 : index
    %53 = vector.load %arg10[%c0_32, %c0_33] : memref<1x4xf32, #tpu.memory_space<vmem>>, vector<1x4xf32>
    %54 = vector.broadcast %53 : vector<1x4xf32> to vector<2x4xf32>
    %55 = arith.mulf %52, %54 : vector<2x4xf32>
    %c0_34 = arith.constant 0 : index
    %c0_35 = arith.constant 0 : index
    %56 = vector.load %arg11[%c0_34, %c0_35] : memref<1x4xf32, #tpu.memory_space<vmem>>, vector<1x4xf32>
    %57 = vector.broadcast %56 : vector<1x4xf32> to vector<2x4xf32>
    %58 = arith.addf %55, %57 : vector<2x4xf32>
    %c0_36 = arith.constant 0 : index
    %c0_37 = arith.constant 0 : index
    %59 = vector.load %arg12[%c0_36, %c0_37] : memref<2x4xf32, #tpu.memory_space<vmem>>, vector<2x4xf32>
    tpu.vector_store %arg12[%c0_36, %c0_37], %58 {strides = array<i32>} : memref<2x4xf32, #tpu.memory_space<vmem>>, vector<2x4xf32>,
    return
  }
}

</mosaic_0001>

<llo_original>
// kernel: tpu_custom_call.1
$region0: #{tpu_custom_call.1}
  #allocation0 [shape = 'u32[]', space=smem, size = 0x4, offset = 0x4, fixed_abs, tag = 'smem constant byte address 0x4 - core index']
  #allocation1 [shape = 'u32[72,128]{1,0:T(1,128)}', space=vmem, size = 0x9000, scoped, tag = 'internal scratch']
  %s0 = inlined_call_operand.vmem [shape: f32[2,1024], index: 0, kind: input, shape index: {}]
  %s1 = inlined_call_operand.hbm [shape: bf16[1024,256], index: 1, kind: input, shape index: {}]
  %s2 = inlined_call_operand.vmem [shape: bf16[256,64], index: 2, kind: input, shape index: {}]
  %s3 = inlined_call_operand.vmem [shape: bf16[64,16], index: 3, kind: input, shape index: {}]
  %s4 = inlined_call_operand.vmem [shape: bf16[16,16], index: 4, kind: input, shape index: {}]
  %s5 = inlined_call_operand.vmem [shape: f32[1,256], index: 5, kind: input, shape index: {}]
  %s6 = inlined_call_operand.vmem [shape: f32[1,64], index: 6, kind: input, shape index: {}]
  %s7 = inlined_call_operand.vmem [shape: f32[1,16], index: 7, kind: input, shape index: {}]
  %s8 = inlined_call_operand.vmem [shape: f32[1,16], index: 8, kind: input, shape index: {}]
  %s9 = inlined_call_operand.vmem [shape: f32[16,4], index: 9, kind: input, shape index: {}]
  %s10 = inlined_call_operand.vmem [shape: f32[1,4], index: 10, kind: input, shape index: {}]
  %s11 = inlined_call_operand.vmem [shape: f32[1,4], index: 11, kind: input, shape index: {}]
  %s12 = inlined_call_operand.hbm [shape: f32[2,4], index: 12, kind: output, shape index: {}]
  %s13 = sld [smem:[#allocation0]]
  $region62: #{tpu_custom_call.1} parent=0
    _
  %s15 = ssub.s32 1, %s13
  %s16 = scalar_select 0, %s15, %s13
  $region1: #{tpu_custom_call.1} parent=0
    #allocation2 [shape = 'u8[524288]{0}', space=vmem, size = 0x80000, scoped, tag = 'input window, operand 1, single buffered']
    #allocation3 [shape = 's32[1]{0}', space=sflag, size = 0x4, scoped, tag = 'scoped memory for tpu_custom_call.1']
    #allocation4 [shape = 's32[1]{0}', space=sflag, size = 0x4, scoped, tag = 'scoped memory for tpu_custom_call.1']
    #allocation5 [shape = 'u8[1024]{0}', space=vmem, size = 0x400, scoped, tag = 'output window, operand 0, single buffered']
    %17 = vsyncpa [#allocation3], 0
    %18 = vsyncpa [#allocation4], 0
    // Predicated region
    $region2: #{tpu_custom_call.1} parent=1 // pred_check
      _
    $region3: #{tpu_custom_call.1} parent=1 // pred_check_branch
      %20 = sbr.rel (0) target = $region5
    $region4: #{tpu_custom_call.1} parent=1 // pred_region
      _
    $region5: #{tpu_custom_call.1} parent=1 // pred_fallthru
      _
    // Predicated region
    $region6: #{tpu_custom_call.1} parent=1 // pred_check
      _
    $region7: #{tpu_custom_call.1} parent=1 // pred_check_branch
      %22 = sbr.rel (0) target = $region9
    $region8: #{tpu_custom_call.1} parent=1 // pred_region
      %24 = vsyncadd [#allocation3], 0
      %s25 = sshll.u32 %s1, 4
      %s26 = int_to_ptr.hbm [resolvable:$true] %s25
      %s27 = sshll.u32 [#allocation2], 4
      %s28 = int_to_ptr.vmem [resolvable:$true] %s27
      %33 = dma.hbm_to_vmem [thread:$0]  %s26, 16384, %s28, [#allocation3], 128, 128, 8
    $region9: #{tpu_custom_call.1} parent=1 // pred_fallthru
      _
    // Predicated region
    $region10: #{tpu_custom_call.1} parent=1 // pred_check
      _
    $region11: #{tpu_custom_call.1} parent=1 // pred_check_branch
      %35 = sbr.rel (0) target = $region13
    $region12: #{tpu_custom_call.1} parent=1 // pred_region
      _
    $region13: #{tpu_custom_call.1} parent=1 // pred_fallthru
      _
    // Predicated region
    $region14: #{tpu_custom_call.1} parent=1 // pred_check
      _
    $region15: #{tpu_custom_call.1} parent=1 // pred_check_branch
      %37 = sbr.rel (0) target = $region17
    $region16: #{tpu_custom_call.1} parent=1 // pred_region
      _
    $region17: #{tpu_custom_call.1} parent=1 // pred_fallthru
      _
    // Predicated region
    $region18: #{tpu_custom_call.1} parent=1 // pred_check
      _
    $region19: #{tpu_custom_call.1} parent=1 // pred_check_branch
      %39 = sbr.rel (0) target = $region21
    $region20: #{tpu_custom_call.1} parent=1 // pred_region
      _
    $region21: #{tpu_custom_call.1} parent=1 // pred_fallthru
      _
    // Predicated region
    $region22: #{tpu_custom_call.1} parent=1 // pred_check
      _
    $region23: #{tpu_custom_call.1} parent=1 // pred_check_branch
      %41 = sbr.rel (0) target = $region25
    $region24: #{tpu_custom_call.1} parent=1 // pred_region
      _
    $region25: #{tpu_custom_call.1} parent=1 // pred_fallthru
      _
    // Predicated region
    $region26: #{tpu_custom_call.1} parent=1 // pred_check
      _
    $region27: #{tpu_custom_call.1} parent=1 // pred_check_branch
      %43 = sbr.rel (0) target = $region29
    $region28: #{tpu_custom_call.1} parent=1 // pred_region
      _
    $region29: #{tpu_custom_call.1} parent=1 // pred_fallthru
      _
    // Predicated region
    $region30: #{tpu_custom_call.1} parent=1 // pred_check
      _
    $region31: #{tpu_custom_call.1} parent=1 // pred_check_branch
      %45 = sbr.rel (0) target = $region33
    $region32: #{tpu_custom_call.1} parent=1 // pred_region
      _
    $region33: #{tpu_custom_call.1} parent=1 // pred_fallthru
      _
    // Predicated region
    $region34: #{tpu_custom_call.1} parent=1 // pred_check
      _
    $region35: #{tpu_custom_call.1} parent=1 // pred_check_branch
      %47 = sbr.rel (0) target = $region37
    $region36: #{tpu_custom_call.1} parent=1 // pred_region
      _
    $region37: #{tpu_custom_call.1} parent=1 // pred_fallthru
      _
    // Predicated region
    $region38: #{tpu_custom_call.1} parent=1 // pred_check
      _
    $region39: #{tpu_custom_call.1} parent=1 // pred_check_branch
      %49 = sbr.rel (0) target = $region41
    $region40: #{tpu_custom_call.1} parent=1 // pred_region
      _
    $region41: #{tpu_custom_call.1} parent=1 // pred_fallthru
      _
    // Predicated region
    $region42: #{tpu_custom_call.1} parent=1 // pred_check
      _
    $region43: #{tpu_custom_call.1} parent=1 // pred_check_branch
      %51 = sbr.rel (0) target = $region45
    $region44: #{tpu_custom_call.1} parent=1 // pred_region
      _
    $region45: #{tpu_custom_call.1} parent=1 // pred_fallthru
      _
    // Predicated region
    $region46: #{tpu_custom_call.1} parent=1 // pred_check
      _
    $region47: #{tpu_custom_call.1} parent=1 // pred_check_branch
      %53 = sbr.rel (0) target = $region49
    $region48: #{tpu_custom_call.1} parent=1 // pred_region
      _
    $region49: #{tpu_custom_call.1} parent=1 // pred_fallthru
      _
    // Predicated region
    $region50: #{tpu_custom_call.1} parent=1 // pred_check
      _
    $region51: #{tpu_custom_call.1} parent=1 // pred_check_branch
      %55 = sbr.rel (0) target = $region53
    $region52: #{tpu_custom_call.1} parent=1 // pred_region
      %57 = dma.done [#allocation3], 16384
    $region53: #{tpu_custom_call.1} parent=1 // pred_fallthru
      _
    %v59 = vld [vmem:[%s0] sm:$0xff]
    %v60 = vld [vmem:[%s0 + $0x8] sm:$0xff]
    %63 = vst [vmem:[#allocation1] ss:$4 sm:$0xff] %v59
    %s64 = scalar_lea.vmem [#allocation1], 32
    %65 = vst [vmem:[%s64] ss:$4 sm:$0xff] %v60
    %v66 = vld.sshfl [vmem:[#allocation1] sm:$0xff pattern:$0x73625140]
    %v67 = vld.sshfl [vmem:[#allocation1 + $0x8] sm:$0xff pattern:$0x73625140]
    %v68 = vld.sshfl [vmem:[#allocation1 + $0x10] sm:$0xff pattern:$0x73625140]
    %v69 = vld.sshfl [vmem:[#allocation1 + $0x18] sm:$0xff pattern:$0x73625140]
    %v70 = vld.sshfl [vmem:[#allocation1 + $0x20] sm:$0xff pattern:$0x73625140]
    %v71 = vld.sshfl [vmem:[#allocation1 + $0x28] sm:$0xff pattern:$0x73625140]
    %v72 = vld.sshfl [vmem:[#allocation1 + $0x30] sm:$0xff pattern:$0x73625140]
    %v73 = vld.sshfl [vmem:[#allocation1 + $0x38] sm:$0xff pattern:$0x73625140]
    %v82 = vpack.c.bf16 %v66, %v66
    %v83 = vpack.c.bf16 %v67, %v67
    %v84 = vpack.c.bf16 %v68, %v68
    %v85 = vpack.c.bf16 %v69, %v69
    %v86 = vpack.c.bf16 %v70, %v70
    %v87 = vpack.c.bf16 %v71, %v71
    %v88 = vpack.c.bf16 %v72, %v72
    %v89 = vpack.c.bf16 %v73, %v73
    %v90 = vld [vmem:[#allocation2] sm:$0xff]
    %v91 = vld [vmem:[#allocation2 + $0x8] sm:$0xff]
    %v92 = vld [vmem:[#allocation2 + $0x10] sm:$0xff]
    %v93 = vld [vmem:[#allocation2 + $0x18] sm:$0xff]
    %v94 = vld [vmem:[#allocation2 + $0x20] sm:$0xff]
    %v95 = vld [vmem:[#allocation2 + $0x28] sm:$0xff]
    %v96 = vld [vmem:[#allocation2 + $0x30] sm:$0xff]
    %v97 = vld [vmem:[#allocation2 + $0x38] sm:$0xff]
    %v98 = vld [vmem:[#allocation2 + $0x40] sm:$0xff]
    %v99 = vld [vmem:[#allocation2 + $0x48] sm:$0xff]
    %v100 = vld [vmem:[#allocation2 + $0x50] sm:$0xff]
    %v101 = vld [vmem:[#allocation2 + $0x58] sm:$0xff]
    %v102 = vld [vmem:[#allocation2 + $0x60] sm:$0xff]
    %v103 = vld [vmem:[#allocation2 + $0x68] sm:$0xff]
    %v104 = vld [vmem:[#allocation2 + $0x70] sm:$0xff]
    %v105 = vld [vmem:[#allocation2 + $0x78] sm:$0xff]
    %v106 = vld [vmem:[#allocation2 + $0x80] sm:$0xff]
    %v107 = vld [vmem:[#allocation2 + $0x88] sm:$0xff]
    %v108 = vld [vmem:[#allocation2 + $0x90] sm:$0xff]
    %v109 = vld [vmem:[#allocation2 + $0x98] sm:$0xff]
    %v110 = vld [vmem:[#allocation2 + $0xa0] sm:$0xff]
    %v111 = vld [vmem:[#allocation2 + $0xa8] sm:$0xff]
    %v112 = vld [vmem:[#allocation2 + $0xb0] sm:$0xff]
    %v113 = vld [vmem:[#allocation2 + $0xb8] sm:$0xff]
    %v114 = vld [vmem:[#allocation2 + $0xc0] sm:$0xff]
    %v115 = vld [vmem:[#allocation2 + $0xc8] sm:$0xff]
    %v116 = vld [vmem:[#allocation2 + $0xd0] sm:$0xff]
    %v117 = vld [vmem:[#allocation2 + $0xd8] sm:$0xff]
    %v118 = vld [vmem:[#allocation2 + $0xe0] sm:$0xff]
    %v119 = vld [vmem:[#allocation2 + $0xe8] sm:$0xff]
    %v120 = vld [vmem:[#allocation2 + $0xf0] sm:$0xff]
    %v121 = vld [vmem:[#allocation2 + $0xf8] sm:$0xff]
    %v122 = vld [vmem:[#allocation2 + $0x100] sm:$0xff]
    %v123 = vld [vmem:[#allocation2 + $0x108] sm:$0xff]
    %v124 = vld [vmem:[#allocation2 + $0x110] sm:$0xff]
    %v125 = vld [vmem:[#allocation2 + $0x118] sm:$0xff]
    %v126 = vld [vmem:[#allocation2 + $0x120] sm:$0xff]
    %v127 = vld [vmem:[#allocation2 + $0x128] sm:$0xff]
    %v128 = vld [vmem:[#allocation2 + $0x130] sm:$0xff]
    %v129 = vld [vmem:[#allocation2 + $0x138] sm:$0xff]
    %v130 = vld [vmem:[#allocation2 + $0x140] sm:$0xff]
    %v131 = vld [vmem:[#allocation2 + $0x148] sm:$0xff]
    %v132 = vld [vmem:[#allocation2 + $0x150] sm:$0xff]
    %v133 = vld [vmem:[#allocation2 + $0x158] sm:$0xff]
    %v134 = vld [vmem:[#allocation2 + $0x160] sm:$0xff]
    %v135 = vld [vmem:[#allocation2 + $0x168] sm:$0xff]
    %v136 = vld [vmem:[#allocation2 + $0x170] sm:$0xff]
    %v137 = vld [vmem:[#allocation2 + $0x178] sm:$0xff]
    %v138 = vld [vmem:[#allocation2 + $0x180] sm:$0xff]
    %v139 = vld [vmem:[#allocation2 + $0x188] sm:$0xff]
    %v140 = vld [vmem:[#allocation2 + $0x190] sm:$0xff]
    %v141 = vld [vmem:[#allocation2 + $0x198] sm:$0xff]
    %v142 = vld [vmem:[#allocation2 + $0x1a0] sm:$0xff]
    %v143 = vld [vmem:[#allocation2 + $0x1a8] sm:$0xff]
    %v144 = vld [vmem:[#allocation2 + $0x1b0] sm:$0xff]
    %v145 = vld [vmem:[#allocation2 + $0x1b8] sm:$0xff]
    %v146 = vld [vmem:[#allocation2 + $0x1c0] sm:$0xff]
    %v147 = vld [vmem:[#allocation2 + $0x1c8] sm:$0xff]
    %v148 = vld [vmem:[#allocation2 + $0x1d0] sm:$0xff]
    %v149 = vld [vmem:[#allocation2 + $0x1d8] sm:$0xff]
    %v150 = vld [vmem:[#allocation2 + $0x1e0] sm:$0xff]
    %v151 = vld [vmem:[#allocation2 + $0x1e8] sm:$0xff]
    %v152 = vld [vmem:[#allocation2 + $0x1f0] sm:$0xff]
    %v153 = vld [vmem:[#allocation2 + $0x1f8] sm:$0xff]
    %v154 = vld [vmem:[#allocation2 + $0x200] sm:$0xff]
    %v155 = vld [vmem:[#allocation2 + $0x208] sm:$0xff]
    %v156 = vld [vmem:[#allocation2 + $0x210] sm:$0xff]
    %v157 = vld [vmem:[#allocation2 + $0x218] sm:$0xff]
    %v158 = vld [vmem:[#allocation2 + $0x220] sm:$0xff]
    %v159 = vld [vmem:[#allocation2 + $0x228] sm:$0xff]
    %v160 = vld [vmem:[#allocation2 + $0x230] sm:$0xff]
    %v161 = vld [vmem:[#allocation2 + $0x238] sm:$0xff]
    %v162 = vld [vmem:[#allocation2 + $0x240] sm:$0xff]
    %v163 = vld [vmem:[#allocation2 + $0x248] sm:$0xff]
    %v164 = vld [vmem:[#allocation2 + $0x250] sm:$0xff]
    %v165 = vld [vmem:[#allocation2 + $0x258] sm:$0xff]
    %v166 = vld [vmem:[#allocation2 + $0x260] sm:$0xff]
    %v167 = vld [vmem:[#allocation2 + $0x268] sm:$0xff]
    %v168 = vld [vmem:[#allocation2 + $0x270] sm:$0xff]
    %v169 = vld [vmem:[#allocation2 + $0x278] sm:$0xff]
    %v170 = vld [vmem:[#allocation2 + $0x280] sm:$0xff]
    %v171 = vld [vmem:[#allocation2 + $0x288] sm:$0xff]
    %v172 = vld [vmem:[#allocation2 + $0x290] sm:$0xff]
    %v173 = vld [vmem:[#allocation2 + $0x298] sm:$0xff]
    %v174 = vld [vmem:[#allocation2 + $0x2a0] sm:$0xff]
    %v175 = vld [vmem:[#allocation2 + $0x2a8] sm:$0xff]
    %v176 = vld [vmem:[#allocation2 + $0x2b0] sm:$0xff]
    %v177 = vld [vmem:[#allocation2 + $0x2b8] sm:$0xff]
    %v178 = vld [vmem:[#allocation2 + $0x2c0] sm:$0xff]
    %v179 = vld [vmem:[#allocation2 + $0x2c8] sm:$0xff]
    %v180 = vld [vmem:[#allocation2 + $0x2d0] sm:$0xff]
    %v181 = vld [vmem:[#allocation2 + $0x2d8] sm:$0xff]
    %v182 = vld [vmem:[#allocation2 + $0x2e0] sm:$0xff]
    %v183 = vld [vmem:[#allocation2 + $0x2e8] sm:$0xff]
    %v184 = vld [vmem:[#allocation2 + $0x2f0] sm:$0xff]
    %v185 = vld [vmem:[#allocation2 + $0x2f8] sm:$0xff]
    %v186 = vld [vmem:[#allocation2 + $0x300] sm:$0xff]
    %v187 = vld [vmem:[#allocation2 + $0x308] sm:$0xff]
    %v188 = vld [vmem:[#allocation2 + $0x310] sm:$0xff]
    %v189 = vld [vmem:[#allocation2 + $0x318] sm:$0xff]
    %v190 = vld [vmem:[#allocation2 + $0x320] sm:$0xff]
    %v191 = vld [vmem:[#allocation2 + $0x328] sm:$0xff]
    %v192 = vld [vmem:[#allocation2 + $0x330] sm:$0xff]
    %v193 = vld [vmem:[#allocation2 + $0x338] sm:$0xff]
    %v194 = vld [vmem:[#allocation2 + $0x340] sm:$0xff]
    %v195 = vld [vmem:[#allocation2 + $0x348] sm:$0xff]
    %v196 = vld [vmem:[#allocation2 + $0x350] sm:$0xff]
    %v197 = vld [vmem:[#allocation2 + $0x358] sm:$0xff]
    %v198 = vld [vmem:[#allocation2 + $0x360] sm:$0xff]
    %v199 = vld [vmem:[#allocation2 + $0x368] sm:$0xff]
    %v200 = vld [vmem:[#allocation2 + $0x370] sm:$0xff]
    %v201 = vld [vmem:[#allocation2 + $0x378] sm:$0xff]
    %v202 = vld [vmem:[#allocation2 + $0x380] sm:$0xff]
    %v203 = vld [vmem:[#allocation2 + $0x388] sm:$0xff]
    %v204 = vld [vmem:[#allocation2 + $0x390] sm:$0xff]
    %v205 = vld [vmem:[#allocation2 + $0x398] sm:$0xff]
    %v206 = vld [vmem:[#allocation2 + $0x3a0] sm:$0xff]
    %v207 = vld [vmem:[#allocation2 + $0x3a8] sm:$0xff]
    %v208 = vld [vmem:[#allocation2 + $0x3b0] sm:$0xff]
    %v209 = vld [vmem:[#allocation2 + $0x3b8] sm:$0xff]
    %v210 = vld [vmem:[#allocation2 + $0x3c0] sm:$0xff]
    %v211 = vld [vmem:[#allocation2 + $0x3c8] sm:$0xff]
    %v212 = vld [vmem:[#allocation2 + $0x3d0] sm:$0xff]
    %v213 = vld [vmem:[#allocation2 + $0x3d8] sm:$0xff]
    %v214 = vld [vmem:[#allocation2 + $0x3e0] sm:$0xff]
    %v215 = vld [vmem:[#allocation2 + $0x3e8] sm:$0xff]
    %v216 = vld [vmem:[#allocation2 + $0x3f0] sm:$0xff]
    %v217 = vld [vmem:[#allocation2 + $0x3f8] sm:$0xff]
    %v218 = vld [vmem:[%s5] sm:$0x3]
    %v220 = vperm.slane %v218, 0
    %v221 = vperm.slane %v218, 1
    %v352 = vunpack.c.l.b16 %v90
    %v353 = vunpack.c.h.b16 %v90
    %v354 = vunpack.c.l.b16 %v91
    %v355 = vunpack.c.h.b16 %v91
    %v356 = vunpack.c.l.b16 %v92
    %v357 = vunpack.c.h.b16 %v92
    %v358 = vunpack.c.l.b16 %v93
    %v359 = vunpack.c.h.b16 %v93
    %v360 = vunpack.c.l.b16 %v94
    %v361 = vunpack.c.h.b16 %v94
    %v362 = vunpack.c.l.b16 %v95
    %v363 = vunpack.c.h.b16 %v95
    %v364 = vunpack.c.l.b16 %v96
    %v365 = vunpack.c.h.b16 %v96
    %v366 = vunpack.c.l.b16 %v97
    %v367 = vunpack.c.h.b16 %v97
    %v368 = vunpack.c.l.b16 %v98
    %v369 = vunpack.c.h.b16 %v98
    %v370 = vunpack.c.l.b16 %v99
    %v371 = vunpack.c.h.b16 %v99
    %v372 = vunpack.c.l.b16 %v100
    %v373 = vunpack.c.h.b16 %v100
    %v374 = vunpack.c.l.b16 %v101
    %v375 = vunpack.c.h.b16 %v101
    %v376 = vunpack.c.l.b16 %v102
    %v377 = vunpack.c.h.b16 %v102
    %v378 = vunpack.c.l.b16 %v103
    %v379 = vunpack.c.h.b16 %v103
    %v380 = vunpack.c.l.b16 %v104
    %v381 = vunpack.c.h.b16 %v104
    %v382 = vunpack.c.l.b16 %v105
    %v383 = vunpack.c.h.b16 %v105
    %v384 = vunpack.c.l.b16 %v106
    %v385 = vunpack.c.h.b16 %v106
    %v386 = vunpack.c.l.b16 %v107
    %v387 = vunpack.c.h.b16 %v107
    %v388 = vunpack.c.l.b16 %v108
    %v389 = vunpack.c.h.b16 %v108
    %v390 = vunpack.c.l.b16 %v109
    %v391 = vunpack.c.h.b16 %v109
    %v392 = vunpack.c.l.b16 %v110
    %v393 = vunpack.c.h.b16 %v110
    %v394 = vunpack.c.l.b16 %v111
    %v395 = vunpack.c.h.b16 %v111
    %v396 = vunpack.c.l.b16 %v112
    %v397 = vunpack.c.h.b16 %v112
    %v398 = vunpack.c.l.b16 %v113
    %v399 = vunpack.c.h.b16 %v113
    %v400 = vunpack.c.l.b16 %v114
    %v401 = vunpack.c.h.b16 %v114
    %v402 = vunpack.c.l.b16 %v115
    %v403 = vunpack.c.h.b16 %v115
    %v404 = vunpack.c.l.b16 %v116
    %v405 = vunpack.c.h.b16 %v116
    %v406 = vunpack.c.l.b16 %v117
    %v407 = vunpack.c.h.b16 %v117
    %v408 = vunpack.c.l.b16 %v118
    %v409 = vunpack.c.h.b16 %v118
    %v410 = vunpack.c.l.b16 %v119
    %v411 = vunpack.c.h.b16 %v119
    %v412 = vunpack.c.l.b16 %v120
    %v413 = vunpack.c.h.b16 %v120
    %v414 = vunpack.c.l.b16 %v121
    %v415 = vunpack.c.h.b16 %v121
    %v416 = vunpack.c.l.b16 %v122
    %v417 = vunpack.c.h.b16 %v122
    %v418 = vunpack.c.l.b16 %v123
    %v419 = vunpack.c.h.b16 %v123
    %v420 = vunpack.c.l.b16 %v124
    %v421 = vunpack.c.h.b16 %v124
    %v422 = vunpack.c.l.b16 %v125
    %v423 = vunpack.c.h.b16 %v125
    %v424 = vunpack.c.l.b16 %v126
    %v425 = vunpack.c.h.b16 %v126
    %v426 = vunpack.c.l.b16 %v127
    %v427 = vunpack.c.h.b16 %v127
    %v428 = vunpack.c.l.b16 %v128
    %v429 = vunpack.c.h.b16 %v128
    %v430 = vunpack.c.l.b16 %v129
    %v431 = vunpack.c.h.b16 %v129
    %v432 = vunpack.c.l.b16 %v130
    %v433 = vunpack.c.h.b16 %v130
    %v434 = vunpack.c.l.b16 %v131
    %v435 = vunpack.c.h.b16 %v131
    %v436 = vunpack.c.l.b16 %v132
    %v437 = vunpack.c.h.b16 %v132
    %v438 = vunpack.c.l.b16 %v133
    %v439 = vunpack.c.h.b16 %v133
    %v440 = vunpack.c.l.b16 %v134
    %v441 = vunpack.c.h.b16 %v134
    %v442 = vunpack.c.l.b16 %v135
    %v443 = vunpack.c.h.b16 %v135
    %v444 = vunpack.c.l.b16 %v136
    %v445 = vunpack.c.h.b16 %v136
    %v446 = vunpack.c.l.b16 %v137
    %v447 = vunpack.c.h.b16 %v137
    %v448 = vunpack.c.l.b16 %v138
    %v449 = vunpack.c.h.b16 %v138
    %v450 = vunpack.c.l.b16 %v139
    %v451 = vunpack.c.h.b16 %v139
    %v452 = vunpack.c.l.b16 %v140
    %v453 = vunpack.c.h.b16 %v140
    %v454 = vunpack.c.l.b16 %v141
    %v455 = vunpack.c.h.b16 %v141
    %v456 = vunpack.c.l.b16 %v142
    %v457 = vunpack.c.h.b16 %v142
    %v458 = vunpack.c.l.b16 %v143
    %v459 = vunpack.c.h.b16 %v143
    %v460 = vunpack.c.l.b16 %v144
    %v461 = vunpack.c.h.b16 %v144
    %v462 = vunpack.c.l.b16 %v145
    %v463 = vunpack.c.h.b16 %v145
    %v464 = vunpack.c.l.b16 %v146
    %v465 = vunpack.c.h.b16 %v146
    %v466 = vunpack.c.l.b16 %v147
    %v467 = vunpack.c.h.b16 %v147
    %v468 = vunpack.c.l.b16 %v148
    %v469 = vunpack.c.h.b16 %v148
    %v470 = vunpack.c.l.b16 %v149
    %v471 = vunpack.c.h.b16 %v149
    %v472 = vunpack.c.l.b16 %v150
    %v473 = vunpack.c.h.b16 %v150
    %v474 = vunpack.c.l.b16 %v151
    %v475 = vunpack.c.h.b16 %v151
    %v476 = vunpack.c.l.b16 %v152
    %v477 = vunpack.c.h.b16 %v152
    %v478 = vunpack.c.l.b16 %v153
    %v479 = vunpack.c.h.b16 %v153
    %v480 = vunpack.c.l.b16 %v154
    %v481 = vunpack.c.h.b16 %v154
    %v482 = vunpack.c.l.b16 %v155
    %v483 = vunpack.c.h.b16 %v155
    %v484 = vunpack.c.l.b16 %v156
    %v485 = vunpack.c.h.b16 %v156
    %v486 = vunpack.c.l.b16 %v157
    %v487 = vunpack.c.h.b16 %v157
    %v488 = vunpack.c.l.b16 %v158
    %v489 = vunpack.c.h.b16 %v158
    %v490 = vunpack.c.l.b16 %v159
    %v491 = vunpack.c.h.b16 %v159
    %v492 = vunpack.c.l.b16 %v160
    %v493 = vunpack.c.h.b16 %v160
    %v494 = vunpack.c.l.b16 %v161
    %v495 = vunpack.c.h.b16 %v161
    %v496 = vunpack.c.l.b16 %v162
    %v497 = vunpack.c.h.b16 %v162
    %v498 = vunpack.c.l.b16 %v163
    %v499 = vunpack.c.h.b16 %v163
    %v500 = vunpack.c.l.b16 %v164
    %v501 = vunpack.c.h.b16 %v164
    %v502 = vunpack.c.l.b16 %v165
    %v503 = vunpack.c.h.b16 %v165
    %v504 = vunpack.c.l.b16 %v166
    %v505 = vunpack.c.h.b16 %v166
    %v506 = vunpack.c.l.b16 %v167
    %v507 = vunpack.c.h.b16 %v167
    %v508 = vunpack.c.l.b16 %v168
    %v509 = vunpack.c.h.b16 %v168
    %v510 = vunpack.c.l.b16 %v169
    %v511 = vunpack.c.h.b16 %v169
    %v512 = vunpack.c.l.b16 %v170
    %v513 = vunpack.c.h.b16 %v170
    %v514 = vunpack.c.l.b16 %v171
    %v515 = vunpack.c.h.b16 %v171
    %v516 = vunpack.c.l.b16 %v172
    %v517 = vunpack.c.h.b16 %v172
    %v518 = vunpack.c.l.b16 %v173
    %v519 = vunpack.c.h.b16 %v173
    %v520 = vunpack.c.l.b16 %v174
    %v521 = vunpack.c.h.b16 %v174
    %v522 = vunpack.c.l.b16 %v175
    %v523 = vunpack.c.h.b16 %v175
    %v524 = vunpack.c.l.b16 %v176
    %v525 = vunpack.c.h.b16 %v176
    %v526 = vunpack.c.l.b16 %v177
    %v527 = vunpack.c.h.b16 %v177
    %v528 = vunpack.c.l.b16 %v178
    %v529 = vunpack.c.h.b16 %v178
    %v530 = vunpack.c.l.b16 %v179
    %v531 = vunpack.c.h.b16 %v179
    %v532 = vunpack.c.l.b16 %v180
    %v533 = vunpack.c.h.b16 %v180
    %v534 = vunpack.c.l.b16 %v181
    %v535 = vunpack.c.h.b16 %v181
    %v536 = vunpack.c.l.b16 %v182
    %v537 = vunpack.c.h.b16 %v182
    %v538 = vunpack.c.l.b16 %v183
    %v539 = vunpack.c.h.b16 %v183
    %v540 = vunpack.c.l.b16 %v184
    %v541 = vunpack.c.h.b16 %v184
    %v542 = vunpack.c.l.b16 %v185
    %v543 = vunpack.c.h.b16 %v185
    %v544 = vunpack.c.l.b16 %v186
    %v545 = vunpack.c.h.b16 %v186
    %v546 = vunpack.c.l.b16 %v187
    %v547 = vunpack.c.h.b16 %v187
    %v548 = vunpack.c.l.b16 %v188
    %v549 = vunpack.c.h.b16 %v188
    %v550 = vunpack.c.l.b16 %v189
    %v551 = vunpack.c.h.b16 %v189
    %v552 = vunpack.c.l.b16 %v190
    %v553 = vunpack.c.h.b16 %v190
    %v554 = vunpack.c.l.b16 %v191
    %v555 = vunpack.c.h.b16 %v191
    %v556 = vunpack.c.l.b16 %v192
    %v557 = vunpack.c.h.b16 %v192
    %v558 = vunpack.c.l.b16 %v193
    %v559 = vunpack.c.h.b16 %v193
    %v560 = vunpack.c.l.b16 %v194
    %v561 = vunpack.c.h.b16 %v194
    %v562 = vunpack.c.l.b16 %v195
    %v563 = vunpack.c.h.b16 %v195
    %v564 = vunpack.c.l.b16 %v196
    %v565 = vunpack.c.h.b16 %v196
    %v566 = vunpack.c.l.b16 %v197
    %v567 = vunpack.c.h.b16 %v197
    %v568 = vunpack.c.l.b16 %v198
    %v569 = vunpack.c.h.b16 %v198
    %v570 = vunpack.c.l.b16 %v199
    %v571 = vunpack.c.h.b16 %v199
    %v572 = vunpack.c.l.b16 %v200
    %v573 = vunpack.c.h.b16 %v200
    %v574 = vunpack.c.l.b16 %v201
    %v575 = vunpack.c.h.b16 %v201
    %v576 = vunpack.c.l.b16 %v202
    %v577 = vunpack.c.h.b16 %v202
    %v578 = vunpack.c.l.b16 %v203
    %v579 = vunpack.c.h.b16 %v203
    %v580 = vunpack.c.l.b16 %v204
    %v581 = vunpack.c.h.b16 %v204
    %v582 = vunpack.c.l.b16 %v205
    %v583 = vunpack.c.h.b16 %v205
    %v584 = vunpack.c.l.b16 %v206
    %v585 = vunpack.c.h.b16 %v206
    %v586 = vunpack.c.l.b16 %v207
    %v587 = vunpack.c.h.b16 %v207
    %v588 = vunpack.c.l.b16 %v208
    %v589 = vunpack.c.h.b16 %v208
    %v590 = vunpack.c.l.b16 %v209
    %v591 = vunpack.c.h.b16 %v209
    %v592 = vunpack.c.l.b16 %v210
    %v593 = vunpack.c.h.b16 %v210
    %v594 = vunpack.c.l.b16 %v211
    %v595 = vunpack.c.h.b16 %v211
    %v596 = vunpack.c.l.b16 %v212
    %v597 = vunpack.c.h.b16 %v212
    %v598 = vunpack.c.l.b16 %v213
    %v599 = vunpack.c.h.b16 %v213
    %v600 = vunpack.c.l.b16 %v214
    %v601 = vunpack.c.h.b16 %v214
    %v602 = vunpack.c.l.b16 %v215
    %v603 = vunpack.c.h.b16 %v215
    %v604 = vunpack.c.l.b16 %v216
    %v605 = vunpack.c.h.b16 %v216
    %v606 = vunpack.c.l.b16 %v217
    %v607 = vunpack.c.h.b16 %v217
    %v608 = vpack.c.b16 %v354, %v352
    %v609 = vpack.c.b16 %v355, %v353
    %v610 = vpack.c.b16 %v358, %v356
    %v611 = vpack.c.b16 %v359, %v357
    %v612 = vpack.c.b16 %v362, %v360
    %v613 = vpack.c.b16 %v363, %v361
    %v614 = vpack.c.b16 %v366, %v364
    %v615 = vpack.c.b16 %v367, %v365
    %v616 = vpack.c.b16 %v370, %v368
    %v617 = vpack.c.b16 %v371, %v369
    %v618 = vpack.c.b16 %v374, %v372
    %v619 = vpack.c.b16 %v375, %v373
    %v620 = vpack.c.b16 %v378, %v376
    %v621 = vpack.c.b16 %v379, %v377
    %v622 = vpack.c.b16 %v382, %v380
    %v623 = vpack.c.b16 %v383, %v381
    %v624 = vpack.c.b16 %v386, %v384
    %v625 = vpack.c.b16 %v387, %v385
    %v626 = vpack.c.b16 %v390, %v388
    %v627 = vpack.c.b16 %v391, %v389
    %v628 = vpack.c.b16 %v394, %v392
    %v629 = vpack.c.b16 %v395, %v393
    %v630 = vpack.c.b16 %v398, %v396
    %v631 = vpack.c.b16 %v399, %v397
    %v632 = vpack.c.b16 %v402, %v400
    %v633 = vpack.c.b16 %v403, %v401
    %v634 = vpack.c.b16 %v406, %v404
    %v635 = vpack.c.b16 %v407, %v405
    %v636 = vpack.c.b16 %v410, %v408
    %v637 = vpack.c.b16 %v411, %v409
    %v638 = vpack.c.b16 %v414, %v412
    %v639 = vpack.c.b16 %v415, %v413
    %v640 = vpack.c.b16 %v418, %v416
    %v641 = vpack.c.b16 %v419, %v417
    %v642 = vpack.c.b16 %v422, %v420
    %v643 = vpack.c.b16 %v423, %v421
    %v644 = vpack.c.b16 %v426, %v424
    %v645 = vpack.c.b16 %v427, %v425
    %v646 = vpack.c.b16 %v430, %v428
    %v647 = vpack.c.b16 %v431, %v429
    %v648 = vpack.c.b16 %v434, %v432
    %v649 = vpack.c.b16 %v435, %v433
    %v650 = vpack.c.b16 %v438, %v436
    %v651 = vpack.c.b16 %v439, %v437
    %v652 = vpack.c.b16 %v442, %v440
    %v653 = vpack.c.b16 %v443, %v441
    %v654 = vpack.c.b16 %v446, %v444
    %v655 = vpack.c.b16 %v447, %v445
    %v656 = vpack.c.b16 %v450, %v448
    %v657 = vpack.c.b16 %v451, %v449
    %v658 = vpack.c.b16 %v454, %v452
    %v659 = vpack.c.b16 %v455, %v453
    %v660 = vpack.c.b16 %v458, %v456
    %v661 = vpack.c.b16 %v459, %v457
    %v662 = vpack.c.b16 %v462, %v460
    %v663 = vpack.c.b16 %v463, %v461
    %v664 = vpack.c.b16 %v466, %v464
    %v665 = vpack.c.b16 %v467, %v465
    %v666 = vpack.c.b16 %v470, %v468
    %v667 = vpack.c.b16 %v471, %v469
    %v668 = vpack.c.b16 %v474, %v472
    %v669 = vpack.c.b16 %v475, %v473
    %v670 = vpack.c.b16 %v478, %v476
    %v671 = vpack.c.b16 %v479, %v477
    %v672 = vpack.c.b16 %v482, %v480
    %v673 = vpack.c.b16 %v483, %v481
    %v674 = vpack.c.b16 %v486, %v484
    %v675 = vpack.c.b16 %v487, %v485
    %v676 = vpack.c.b16 %v490, %v488
    %v677 = vpack.c.b16 %v491, %v489
    %v678 = vpack.c.b16 %v494, %v492
    %v679 = vpack.c.b16 %v495, %v493
    %v680 = vpack.c.b16 %v498, %v496
    %v681 = vpack.c.b16 %v499, %v497
    %v682 = vpack.c.b16 %v502, %v500
    %v683 = vpack.c.b16 %v503, %v501
    %v684 = vpack.c.b16 %v506, %v504
    %v685 = vpack.c.b16 %v507, %v505
    %v686 = vpack.c.b16 %v510, %v508
    %v687 = vpack.c.b16 %v511, %v509
    %v688 = vpack.c.b16 %v514, %v512
    %v689 = vpack.c.b16 %v515, %v513
    %v690 = vpack.c.b16 %v518, %v516
    %v691 = vpack.c.b16 %v519, %v517
    %v692 = vpack.c.b16 %v522, %v520
    %v693 = vpack.c.b16 %v523, %v521
    %v694 = vpack.c.b16 %v526, %v524
    %v695 = vpack.c.b16 %v527, %v525
    %v696 = vpack.c.b16 %v530, %v528
    %v697 = vpack.c.b16 %v531, %v529
    %v698 = vpack.c.b16 %v534, %v532
    %v699 = vpack.c.b16 %v535, %v533
    %v700 = vpack.c.b16 %v538, %v536
    %v701 = vpack.c.b16 %v539, %v537
    %v702 = vpack.c.b16 %v542, %v540
    %v703 = vpack.c.b16 %v543, %v541
    %v704 = vpack.c.b16 %v546, %v544
    %v705 = vpack.c.b16 %v547, %v545
    %v706 = vpack.c.b16 %v550, %v548
    %v707 = vpack.c.b16 %v551, %v549
    %v708 = vpack.c.b16 %v554, %v552
    %v709 = vpack.c.b16 %v555, %v553
    %v710 = vpack.c.b16 %v558, %v556
    %v711 = vpack.c.b16 %v559, %v557
    %v712 = vpack.c.b16 %v562, %v560
    %v713 = vpack.c.b16 %v563, %v561
    %v714 = vpack.c.b16 %v566, %v564
    %v715 = vpack.c.b16 %v567, %v565
    %v716 = vpack.c.b16 %v570, %v568
    %v717 = vpack.c.b16 %v571, %v569
    %v718 = vpack.c.b16 %v574, %v572
    %v719 = vpack.c.b16 %v575, %v573
    %v720 = vpack.c.b16 %v578, %v576
    %v721 = vpack.c.b16 %v579, %v577
    %v722 = vpack.c.b16 %v582, %v580
    %v723 = vpack.c.b16 %v583, %v581
    %v724 = vpack.c.b16 %v586, %v584
    %v725 = vpack.c.b16 %v587, %v585
    %v726 = vpack.c.b16 %v590, %v588
    %v727 = vpack.c.b16 %v591, %v589
    %v728 = vpack.c.b16 %v594, %v592
    %v729 = vpack.c.b16 %v595, %v593
    %v730 = vpack.c.b16 %v598, %v596
    %v731 = vpack.c.b16 %v599, %v597
    %v732 = vpack.c.b16 %v602, %v600
    %v733 = vpack.c.b16 %v603, %v601
    %v734 = vpack.c.b16 %v606, %v604
    %v735 = vpack.c.b16 %v607, %v605
    %864 = vmatpush.bf16.msra.mxu0 %v622
    %865 = vmatpush.bf16.msra.mxu0 %v620
    %866 = vmatpush.bf16.msra.mxu0 %v618
    %867 = vmatpush.bf16.msra.mxu0 %v616
    %868 = vmatpush.bf16.msra.mxu0 %v614
    %869 = vmatpush.bf16.msra.mxu0 %v612
    %870 = vmatpush.bf16.msra.mxu0 %v610
    %871 = vmatpush.bf16.msra.mxu0 %v608
    %872 = vmatmul.bf16.gmra.mxu0 %v82
    %v873 = vpop.f32.mrf.mxu0
    %v874 = vadd.f32 %v220, %v873
    %v875 = vpop.f32.mrf.mxu0
    %876 = vdwg.mxu0
    %877 = vmatpush.bf16.msra.mxu0 %v638
    %878 = vmatpush.bf16.msra.mxu0 %v636
    %879 = vmatpush.bf16.msra.mxu0 %v634
    %880 = vmatpush.bf16.msra.mxu0 %v632
    %881 = vmatpush.bf16.msra.mxu0 %v630
    %882 = vmatpush.bf16.msra.mxu0 %v628
    %883 = vmatpush.bf16.msra.mxu0 %v626
    %884 = vmatpush.bf16.msra.mxu0 %v624
    %885 = vmatmul.bf16.gmra.mxu0 %v83
    %v886 = vpop.f32.mrf.mxu0
    %v887 = vadd.f32 %v874, %v886
    %v888 = vpop.f32.mrf.mxu0
    %889 = vdwg.mxu0
    %890 = vmatpush.bf16.msra.mxu0 %v654
    %891 = vmatpush.bf16.msra.mxu0 %v652
    %892 = vmatpush.bf16.msra.mxu0 %v650
    %893 = vmatpush.bf16.msra.mxu0 %v648
    %894 = vmatpush.bf16.msra.mxu0 %v646
    %895 = vmatpush.bf16.msra.mxu0 %v644
    %896 = vmatpush.bf16.msra.mxu0 %v642
    %897 = vmatpush.bf16.msra.mxu0 %v640
    %898 = vmatmul.bf16.gmra.mxu0 %v84
    %v899 = vpop.f32.mrf.mxu0
    %v900 = vadd.f32 %v887, %v899
    %v901 = vpop.f32.mrf.mxu0
    %902 = vdwg.mxu0
    %903 = vmatpush.bf16.msra.mxu0 %v670
    %904 = vmatpush.bf16.msra.mxu0 %v668
    %905 = vmatpush.bf16.msra.mxu0 %v666
    %906 = vmatpush.bf16.msra.mxu0 %v664
    %907 = vmatpush.bf16.msra.mxu0 %v662
    %908 = vmatpush.bf16.msra.mxu0 %v660
    %909 = vmatpush.bf16.msra.mxu0 %v658
    %910 = vmatpush.bf16.msra.mxu0 %v656
    %911 = vmatmul.bf16.gmra.mxu0 %v85
    %v912 = vpop.f32.mrf.mxu0
    %v913 = vadd.f32 %v900, %v912
    %v914 = vpop.f32.mrf.mxu0
    %915 = vdwg.mxu0
    %916 = vmatpush.bf16.msra.mxu0 %v686
    %917 = vmatpush.bf16.msra.mxu0 %v684
    %918 = vmatpush.bf16.msra.mxu0 %v682
    %919 = vmatpush.bf16.msra.mxu0 %v680
    %920 = vmatpush.bf16.msra.mxu0 %v678
    %921 = vmatpush.bf16.msra.mxu0 %v676
    %922 = vmatpush.bf16.msra.mxu0 %v674
    %923 = vmatpush.bf16.msra.mxu0 %v672
    %924 = vmatmul.bf16.gmra.mxu0 %v86
    %v925 = vpop.f32.mrf.mxu0
    %v926 = vadd.f32 %v913, %v925
    %v927 = vpop.f32.mrf.mxu0
    %928 = vdwg.mxu0
    %929 = vmatpush.bf16.msra.mxu0 %v702
    %930 = vmatpush.bf16.msra.mxu0 %v700
    %931 = vmatpush.bf16.msra.mxu0 %v698
    %932 = vmatpush.bf16.msra.mxu0 %v696
    %933 = vmatpush.bf16.msra.mxu0 %v694
    %934 = vmatpush.bf16.msra.mxu0 %v692
    %935 = vmatpush.bf16.msra.mxu0 %v690
    %936 = vmatpush.bf16.msra.mxu0 %v688
    %937 = vmatmul.bf16.gmra.mxu0 %v87
    %v938 = vpop.f32.mrf.mxu0
    %v939 = vadd.f32 %v926, %v938
    %v940 = vpop.f32.mrf.mxu0
    %941 = vdwg.mxu0
    %942 = vmatpush.bf16.msra.mxu0 %v718
    %943 = vmatpush.bf16.msra.mxu0 %v716
    %944 = vmatpush.bf16.msra.mxu0 %v714
    %945 = vmatpush.bf16.msra.mxu0 %v712
    %946 = vmatpush.bf16.msra.mxu0 %v710
    %947 = vmatpush.bf16.msra.mxu0 %v708
    %948 = vmatpush.bf16.msra.mxu0 %v706
    %949 = vmatpush.bf16.msra.mxu0 %v704
    %950 = vmatmul.bf16.gmra.mxu0 %v88
    %v951 = vpop.f32.mrf.mxu0
    %v952 = vadd.f32 %v939, %v951
    %v953 = vpop.f32.mrf.mxu0
    %954 = vdwg.mxu0
    %955 = vmatpush.bf16.msra.mxu0 %v734
    %956 = vmatpush.bf16.msra.mxu0 %v732
    %957 = vmatpush.bf16.msra.mxu0 %v730
    %958 = vmatpush.bf16.msra.mxu0 %v728
    %959 = vmatpush.bf16.msra.mxu0 %v726
    %960 = vmatpush.bf16.msra.mxu0 %v724
    %961 = vmatpush.bf16.msra.mxu0 %v722
    %962 = vmatpush.bf16.msra.mxu0 %v720
    %963 = vmatmul.bf16.gmra.mxu0 %v89
    %v964 = vpop.f32.mrf.mxu0
    %v965 = vadd.f32 %v952, %v964
    %v966 = vpop.f32.mrf.mxu0
    %967 = vdwg.mxu0
    %968 = vmatpush.bf16.msra.mxu0 %v623
    %969 = vmatpush.bf16.msra.mxu0 %v621
    %970 = vmatpush.bf16.msra.mxu0 %v619
    %971 = vmatpush.bf16.msra.mxu0 %v617
    %972 = vmatpush.bf16.msra.mxu0 %v615
    %973 = vmatpush.bf16.msra.mxu0 %v613
    %974 = vmatpush.bf16.msra.mxu0 %v611
    %975 = vmatpush.bf16.msra.mxu0 %v609
    %976 = vmatmul.bf16.gmra.mxu0 %v82
    %v977 = vpop.f32.mrf.mxu0
    %v978 = vadd.f32 %v221, %v977
    %v979 = vpop.f32.mrf.mxu0
    %980 = vdwg.mxu0
    %981 = vmatpush.bf16.msra.mxu0 %v639
    %982 = vmatpush.bf16.msra.mxu0 %v637
    %983 = vmatpush.bf16.msra.mxu0 %v635
    %984 = vmatpush.bf16.msra.mxu0 %v633
    %985 = vmatpush.bf16.msra.mxu0 %v631
    %986 = vmatpush.bf16.msra.mxu0 %v629
    %987 = vmatpush.bf16.msra.mxu0 %v627
    %988 = vmatpush.bf16.msra.mxu0 %v625
    %989 = vmatmul.bf16.gmra.mxu0 %v83
    %v990 = vpop.f32.mrf.mxu0
    %v991 = vadd.f32 %v978, %v990
    %v992 = vpop.f32.mrf.mxu0
    %993 = vdwg.mxu0
    %994 = vmatpush.bf16.msra.mxu0 %v655
    %995 = vmatpush.bf16.msra.mxu0 %v653
    %996 = vmatpush.bf16.msra.mxu0 %v651
    %997 = vmatpush.bf16.msra.mxu0 %v649
    %998 = vmatpush.bf16.msra.mxu0 %v647
    %999 = vmatpush.bf16.msra.mxu0 %v645
    %1000 = vmatpush.bf16.msra.mxu0 %v643
    %1001 = vmatpush.bf16.msra.mxu0 %v641
    %1002 = vmatmul.bf16.gmra.mxu0 %v84
    %v1003 = vpop.f32.mrf.mxu0
    %v1004 = vadd.f32 %v991, %v1003
    %v1005 = vpop.f32.mrf.mxu0
    %1006 = vdwg.mxu0
    %1007 = vmatpush.bf16.msra.mxu0 %v671
    %1008 = vmatpush.bf16.msra.mxu0 %v669
    %1009 = vmatpush.bf16.msra.mxu0 %v667
    %1010 = vmatpush.bf16.msra.mxu0 %v665
    %1011 = vmatpush.bf16.msra.mxu0 %v663
    %1012 = vmatpush.bf16.msra.mxu0 %v661
    %1013 = vmatpush.bf16.msra.mxu0 %v659
    %1014 = vmatpush.bf16.msra.mxu0 %v657
    %1015 = vmatmul.bf16.gmra.mxu0 %v85
    %v1016 = vpop.f32.mrf.mxu0
    %v1017 = vadd.f32 %v1004, %v1016
    %v1018 = vpop.f32.mrf.mxu0
    %1019 = vdwg.mxu0
    %1020 = vmatpush.bf16.msra.mxu0 %v687
    %1021 = vmatpush.bf16.msra.mxu0 %v685
    %1022 = vmatpush.bf16.msra.mxu0 %v683
    %1023 = vmatpush.bf16.msra.mxu0 %v681
    %1024 = vmatpush.bf16.msra.mxu0 %v679
    %1025 = vmatpush.bf16.msra.mxu0 %v677
    %1026 = vmatpush.bf16.msra.mxu0 %v675
    %1027 = vmatpush.bf16.msra.mxu0 %v673
    %1028 = vmatmul.bf16.gmra.mxu0 %v86
    %v1029 = vpop.f32.mrf.mxu0
    %v1030 = vadd.f32 %v1017, %v1029
    %v1031 = vpop.f32.mrf.mxu0
    %1032 = vdwg.mxu0
    %1033 = vmatpush.bf16.msra.mxu0 %v703
    %1034 = vmatpush.bf16.msra.mxu0 %v701
    %1035 = vmatpush.bf16.msra.mxu0 %v699
    %1036 = vmatpush.bf16.msra.mxu0 %v697
    %1037 = vmatpush.bf16.msra.mxu0 %v695
    %1038 = vmatpush.bf16.msra.mxu0 %v693
    %1039 = vmatpush.bf16.msra.mxu0 %v691
    %1040 = vmatpush.bf16.msra.mxu0 %v689
    %1041 = vmatmul.bf16.gmra.mxu0 %v87
    %v1042 = vpop.f32.mrf.mxu0
    %v1043 = vadd.f32 %v1030, %v1042
    %v1044 = vpop.f32.mrf.mxu0
    %1045 = vdwg.mxu0
    %1046 = vmatpush.bf16.msra.mxu0 %v719
    %1047 = vmatpush.bf16.msra.mxu0 %v717
    %1048 = vmatpush.bf16.msra.mxu0 %v715
    %1049 = vmatpush.bf16.msra.mxu0 %v713
    %1050 = vmatpush.bf16.msra.mxu0 %v711
    %1051 = vmatpush.bf16.msra.mxu0 %v709
    %1052 = vmatpush.bf16.msra.mxu0 %v707
    %1053 = vmatpush.bf16.msra.mxu0 %v705
    %1054 = vmatmul.bf16.gmra.mxu0 %v88
    %v1055 = vpop.f32.mrf.mxu0
    %v1056 = vadd.f32 %v1043, %v1055
    %v1057 = vpop.f32.mrf.mxu0
    %1058 = vdwg.mxu0
    %1059 = vmatpush.bf16.msra.mxu0 %v735
    %1060 = vmatpush.bf16.msra.mxu0 %v733
    %1061 = vmatpush.bf16.msra.mxu0 %v731
    %1062 = vmatpush.bf16.msra.mxu0 %v729
    %1063 = vmatpush.bf16.msra.mxu0 %v727
    %1064 = vmatpush.bf16.msra.mxu0 %v725
    %1065 = vmatpush.bf16.msra.mxu0 %v723
    %1066 = vmatpush.bf16.msra.mxu0 %v721
    %1067 = vmatmul.bf16.gmra.mxu0 %v89
    %v1068 = vpop.f32.mrf.mxu0
    %v1069 = vadd.f32 %v1056, %v1068
    %v1070 = vpop.f32.mrf.mxu0
    %1071 = vdwg.mxu0
    %v1072 = vmax.f32 %v965, 0.0
    %v1073 = vmax.f32 %v1069, 0.0
    %v1074 = vpack.c.bf16 %v1072, %v1072
    %v1075 = vpack.c.bf16 %v1073, %v1073
    %v1076 = vld [vmem:[%s2] sm:$0xf]
    %v1077 = vld [vmem:[%s2 + $0x4] sm:$0xf]
    %v1078 = vld [vmem:[%s2 + $0x8] sm:$0xf]
    %v1079 = vld [vmem:[%s2 + $0xc] sm:$0xf]
    %v1080 = vld [vmem:[%s2 + $0x10] sm:$0xf]
    %v1081 = vld [vmem:[%s2 + $0x14] sm:$0xf]
    %v1082 = vld [vmem:[%s2 + $0x18] sm:$0xf]
    %v1083 = vld [vmem:[%s2 + $0x1c] sm:$0xf]
    %v1084 = vld [vmem:[%s2 + $0x20] sm:$0xf]
    %v1085 = vld [vmem:[%s2 + $0x24] sm:$0xf]
    %v1086 = vld [vmem:[%s2 + $0x28] sm:$0xf]
    %v1087 = vld [vmem:[%s2 + $0x2c] sm:$0xf]
    %v1088 = vld [vmem:[%s2 + $0x30] sm:$0xf]
    %v1089 = vld [vmem:[%s2 + $0x34] sm:$0xf]
    %v1090 = vld [vmem:[%s2 + $0x38] sm:$0xf]
    %v1091 = vld [vmem:[%s2 + $0x3c] sm:$0xf]
    %v1092 = vld [vmem:[%s2 + $0x40] sm:$0xf]
    %v1093 = vld [vmem:[%s2 + $0x44] sm:$0xf]
    %v1094 = vld [vmem:[%s2 + $0x48] sm:$0xf]
    %v1095 = vld [vmem:[%s2 + $0x4c] sm:$0xf]
    %v1096 = vld [vmem:[%s2 + $0x50] sm:$0xf]
    %v1097 = vld [vmem:[%s2 + $0x54] sm:$0xf]
    %v1098 = vld [vmem:[%s2 + $0x58] sm:$0xf]
    %v1099 = vld [vmem:[%s2 + $0x5c] sm:$0xf]
    %v1100 = vld [vmem:[%s2 + $0x60] sm:$0xf]
    %v1101 = vld [vmem:[%s2 + $0x64] sm:$0xf]
    %v1102 = vld [vmem:[%s2 + $0x68] sm:$0xf]
    %v1103 = vld [vmem:[%s2 + $0x6c] sm:$0xf]
    %v1104 = vld [vmem:[%s2 + $0x70] sm:$0xf]
    %v1105 = vld [vmem:[%s2 + $0x74] sm:$0xf]
    %v1106 = vld [vmem:[%s2 + $0x78] sm:$0xf]
    %v1107 = vld [vmem:[%s2 + $0x7c] sm:$0xf]
    %v1108 = vld [vmem:[%s6] sm:$0x1]
    %v1110 = vperm.slane %v1108, 0
    %v1144 = vunpack.c.l.b16 %v1076
    %v1145 = vunpack.c.l.b16 %v1077
    %v1146 = vunpack.c.l.b16 %v1078
    %v1147 = vunpack.c.l.b16 %v1079
    %v1148 = vunpack.c.l.b16 %v1080
    %v1149 = vunpack.c.l.b16 %v1081
    %v1150 = vunpack.c.l.b16 %v1082
    %v1151 = vunpack.c.l.b16 %v1083
    %v1152 = vunpack.c.l.b16 %v1084
    %v1153 = vunpack.c.l.b16 %v1085
    %v1154 = vunpack.c.l.b16 %v1086
    %v1155 = vunpack.c.l.b16 %v1087
    %v1156 = vunpack.c.l.b16 %v1088
    %v1157 = vunpack.c.l.b16 %v1089
    %v1158 = vunpack.c.l.b16 %v1090
    %v1159 = vunpack.c.l.b16 %v1091
    %v1160 = vunpack.c.l.b16 %v1092
    %v1161 = vunpack.c.l.b16 %v1093
    %v1162 = vunpack.c.l.b16 %v1094
    %v1163 = vunpack.c.l.b16 %v1095
    %v1164 = vunpack.c.l.b16 %v1096
    %v1165 = vunpack.c.l.b16 %v1097
    %v1166 = vunpack.c.l.b16 %v1098
    %v1167 = vunpack.c.l.b16 %v1099
    %v1168 = vunpack.c.l.b16 %v1100
    %v1169 = vunpack.c.l.b16 %v1101
    %v1170 = vunpack.c.l.b16 %v1102
    %v1171 = vunpack.c.l.b16 %v1103
    %v1172 = vunpack.c.l.b16 %v1104
    %v1173 = vunpack.c.l.b16 %v1105
    %v1174 = vunpack.c.l.b16 %v1106
    %v1175 = vunpack.c.l.b16 %v1107
    %v1176 = vpack.c.b16 %v1145, %v1144
    %v1177 = vpack.c.b16 %v1147, %v1146
    %v1178 = vpack.c.b16 %v1149, %v1148
    %v1179 = vpack.c.b16 %v1151, %v1150
    %v1180 = vpack.c.b16 %v1153, %v1152
    %v1181 = vpack.c.b16 %v1155, %v1154
    %v1182 = vpack.c.b16 %v1157, %v1156
    %v1183 = vpack.c.b16 %v1159, %v1158
    %v1184 = vpack.c.b16 %v1161, %v1160
    %v1185 = vpack.c.b16 %v1163, %v1162
    %v1186 = vpack.c.b16 %v1165, %v1164
    %v1187 = vpack.c.b16 %v1167, %v1166
    %v1188 = vpack.c.b16 %v1169, %v1168
    %v1189 = vpack.c.b16 %v1171, %v1170
    %v1190 = vpack.c.b16 %v1173, %v1172
    %v1191 = vpack.c.b16 %v1175, %v1174
    %1208 = vmatpush.bf16.msra.mxu0 %v1183
    %1209 = vmatpush.bf16.msra.mxu0 %v1182
    %1210 = vmatpush.bf16.msra.mxu0 %v1181
    %1211 = vmatpush.bf16.msra.mxu0 %v1180
    %1212 = vmatpush.bf16.msra.mxu0 %v1179
    %1213 = vmatpush.bf16.msra.mxu0 %v1178
    %1214 = vmatpush.bf16.msra.mxu0 %v1177
    %1215 = vmatpush.bf16.msra.mxu0 %v1176
    %1216 = vmatmul.bf16.gmra.mxu0 %v1074
    %v1217 = vpop.f32.mrf.mxu0
    %v1218 = vadd.f32 %v1110, %v1217
    %v1219 = vpop.f32.mrf.mxu0
    %1220 = vdwg.mxu0
    %1221 = vmatpush.bf16.msra.mxu0 %v1191
    %1222 = vmatpush.bf16.msra.mxu0 %v1190
    %1223 = vmatpush.bf16.msra.mxu0 %v1189
    %1224 = vmatpush.bf16.msra.mxu0 %v1188
    %1225 = vmatpush.bf16.msra.mxu0 %v1187
    %1226 = vmatpush.bf16.msra.mxu0 %v1186
    %1227 = vmatpush.bf16.msra.mxu0 %v1185
    %1228 = vmatpush.bf16.msra.mxu0 %v1184
    %1229 = vmatmul.bf16.gmra.mxu0 %v1075
    %v1230 = vpop.f32.mrf.mxu0
    %v1231 = vadd.f32 %v1218, %v1230
    %v1232 = vpop.f32.mrf.mxu0
    %1233 = vdwg.mxu0
    %v1234 = vmax.f32 %v1231, 0.0
    %v1235 = vpack.c.bf16 %v1234, %v1234
    %v1236 = vld [vmem:[%s3] sm:$0xf]
    %v1237 = vld [vmem:[%s3 + $0x4] sm:$0xf]
    %v1238 = vld [vmem:[%s3 + $0x8] sm:$0xf]
    %v1239 = vld [vmem:[%s3 + $0xc] sm:$0xf]
    %v1240 = vld [vmem:[%s3 + $0x10] sm:$0xf]
    %v1241 = vld [vmem:[%s3 + $0x14] sm:$0xf]
    %v1242 = vld [vmem:[%s3 + $0x18] sm:$0xf]
    %v1243 = vld [vmem:[%s3 + $0x1c] sm:$0xf]
    %v1244 = vld [vmem:[%s7] sm:$0x1]
    %v1246 = vperm.slane %v1244, 0
    %v1256 = vunpack.c.l.b16 %v1236
    %v1257 = vunpack.c.l.b16 %v1237
    %v1258 = vunpack.c.l.b16 %v1238
    %v1259 = vunpack.c.l.b16 %v1239
    %v1260 = vunpack.c.l.b16 %v1240
    %v1261 = vunpack.c.l.b16 %v1241
    %v1262 = vunpack.c.l.b16 %v1242
    %v1263 = vunpack.c.l.b16 %v1243
    %v1264 = vpack.c.b16 %v1257, %v1256
    %v1265 = vpack.c.b16 %v1259, %v1258
    %v1266 = vpack.c.b16 %v1261, %v1260
    %v1267 = vpack.c.b16 %v1263, %v1262
    %vm1272 = vcmask 523264
    %v1274 = vsel %vm1272, %v1235, 0
    %1276 = vmatpush.bf16.msra.mxu0 0
    %1277 = vmatpush.bf16.msra.mxu0 0
    %1278 = vmatpush.bf16.msra.mxu0 0
    %1279 = vmatpush.bf16.msra.mxu0 0
    %1280 = vmatpush.bf16.msra.mxu0 %v1267
    %1281 = vmatpush.bf16.msra.mxu0 %v1266
    %1282 = vmatpush.bf16.msra.mxu0 %v1265
    %1283 = vmatpush.bf16.msra.mxu0 %v1264
    %1284 = vmatmul.bf16.gmra.mxu0 %v1274
    %v1285 = vpop.f32.mrf.mxu0
    %v1286 = vadd.f32 %v1246, %v1285
    %v1287 = vpop.f32.mrf.mxu0
    %1288 = vdwg.mxu0
    %v1289 = vmax.f32 %v1286, 0.0
    %v1290 = vpack.c.bf16 %v1289, %v1289
    %v1291 = vld [vmem:[%s4] sm:$0xf]
    %v1292 = vld [vmem:[%s4 + $0x4] sm:$0xf]
    %v1293 = vld [vmem:[%s8] sm:$0x1]
    %v1295 = vperm.slane %v1293, 0
    %v1299 = vunpack.c.l.b16 %v1291
    %v1300 = vunpack.c.l.b16 %v1292
    %v1301 = vpack.c.b16 %v1300, %v1299
    %vm1303 = vcmask 130048
    %v1305 = vsel %vm1303, %v1290, 0
    %1307 = vmatpush.bf16.msra.mxu0 0
    %1308 = vmatpush.bf16.msra.mxu0 0
    %1309 = vmatpush.bf16.msra.mxu0 0
    %1310 = vmatpush.bf16.msra.mxu0 0
    %1311 = vmatpush.bf16.msra.mxu0 0
    %1312 = vmatpush.bf16.msra.mxu0 0
    %1313 = vmatpush.bf16.msra.mxu0 0
    %1314 = vmatpush.bf16.msra.mxu0 %v1301
    %1315 = vmatmul.bf16.gmra.mxu0 %v1305
    %v1316 = vpop.f32.mrf.mxu0
    %v1317 = vadd.f32 %v1295, %v1316
    %v1318 = vpop.f32.mrf.mxu0
    %1319 = vdwg.mxu0
    %v1320 = vmax.f32 %v1317, 0.0
    %v1321 = vld [vmem:[%s9] sm:$0xff]
    %v1322 = vld [vmem:[%s9 + $0x8] sm:$0xff]
    %v1324 = vsel %vm1303, %v1320, 0
    %1326 = vmatpush.msra.mxu0 0.0
    %1327 = vmatpush.msra.mxu0 0.0
    %1328 = vmatpush.msra.mxu0 0.0
    %1329 = vmatpush.msra.mxu0 0.0
    %1330 = vmatpush.msra.mxu0 0.0
    %1331 = vmatpush.msra.mxu0 0.0
    %1332 = vmatpush.msra.mxu0 0.0
    %1333 = vmatpush.msra.mxu0 0.0
    %1334 = vmatpush.msra.mxu0 0.0
    %1335 = vmatpush.msra.mxu0 0.0
    %1336 = vmatpush.msra.mxu0 0.0
    %1337 = vmatpush.msra.mxu0 0.0
    %1338 = vmatpush.msra.mxu0 0.0
    %1339 = vmatpush.msra.mxu0 0.0
    %1340 = vmatpush.msra.mxu0 %v1322
    %1341 = vmatpush.msra.mxu0 %v1321
    %1342 = vmatmul.f32.gmra.mxu0 %v1324
    %v1343 = vpop.f32.mrf.mxu0
    %v1344 = vadd.f32 0.0, %v1343
    %1345 = vdwg.mxu0
    %vm1346 = vcmask 25600
    %v1347 = vsel %vm1346, %v1344, 0.0
    %v1348 = vrot.slane %v1347, 4
    %v1349 = vadd.f32 %v1347, %v1348
    %v1350 = vrot.slane %v1349, 2
    %v1351 = vadd.f32 %v1349, %v1350
    %v1352 = vrot.slane %v1351, 1
    %v1353 = vadd.f32 %v1351, %v1352
    %v1354 = vrcp.pop 2.0
    %v1355 = vmul.f32 2.0, %v1354
    %v1356 = vsub.f32 1.0, %v1355
    %v1357 = vmul.f32 %v1354, %v1356
    %v1358 = vadd.f32 %v1354, %v1357
    %vm1359 = vweird.f32 %v1354
    %v1360 = vsel %vm1359, %v1354, %v1358
    %v1361 = vmul.f32 %v1353, %v1360
    %v1362 = vsub.f32 %v1344, %v1361
    %v1363 = vmul.f32 %v1362, %v1362
    %v1364 = vsel %vm1346, %v1363, 0.0
    %v1365 = vrot.slane %v1364, 4
    %v1366 = vadd.f32 %v1364, %v1365
    %v1367 = vrot.slane %v1366, 2
    %v1368 = vadd.f32 %v1366, %v1367
    %v1369 = vrot.slane %v1368, 1
    %v1370 = vadd.f32 %v1368, %v1369
    %v1371 = vmul.f32 %v1370, %v1360
    %v1372 = vadd.f32 %v1371, 1e-05
    %v1373 = vrsqrt.pop %v1372
    %v1374 = vmul.f32 %v1373, %v1372
    %v1375 = vmul.f32 %v1374, %v1373
    %v1376 = vmul.f32 0.5, %v1375
    %v1377 = vsub.f32 1.5, %v1376
    %v1378 = vmul.f32 %v1373, %v1377
    %vm1379 = vweird.f32 %v1372
    %vm1380 = vweird.f32 %v1373
    %vm1381 = vmor %vm1379, %vm1380
    %v1382 = vsel %vm1381, %v1373, %v1378
    %v1383 = vmul.f32 %v1362, %v1382
    %v1384 = vld [vmem:[%s10] sm:$0x1]
    %v1386 = vperm.slane %v1384, 0
    %v1388 = vmul.f32 %v1383, %v1386
    %v1389 = vld [vmem:[%s11] sm:$0x1]
    %v1391 = vperm.slane %v1389, 0
    %v1393 = vadd.f32 %v1388, %v1391
    %1394 = vst.msk [vmem:[#allocation5] sm:$0x3] %vm1346, %v1393
    // Predicated region
    $region54: #{tpu_custom_call.1} parent=1 // pred_check
      _
    $region55: #{tpu_custom_call.1} parent=1 // pred_check_branch
      %1396 = sbr.rel (0) target = $region57
    $region56: #{tpu_custom_call.1} parent=1 // pred_region
      %1398 = vsyncadd [#allocation4], 0
      %s1400 = sshll.u32 [#allocation5], 4
      %s1401 = int_to_ptr.vmem [resolvable:$true] %s1400
      %s1402 = sshll.u32 %s12, 4
      %s1403 = int_to_ptr.hbm [resolvable:$true] %s1402
      %1405 = dma.vmem_to_hbm [thread:$0]  %s1401, 32, %s1403, [#allocation4]
    $region57: #{tpu_custom_call.1} parent=1 // pred_fallthru
      _
    // Predicated region
    $region58: #{tpu_custom_call.1} parent=1 // pred_check
      _
    $region59: #{tpu_custom_call.1} parent=1 // pred_check_branch
      %1407 = sbr.rel (0) target = $region61
    $region60: #{tpu_custom_call.1} parent=1 // pred_region
      %1409 = dma.done [#allocation4], 32
    $region61: #{tpu_custom_call.1} parent=1 // pred_fallthru
      _
    %1410 = vsyncpa [#allocation3], 1
    %1411 = vsyncpa [#allocation4], 1

</llo_original>
